<compile_context>
chip_gen: v6e
topology: v6e:2x2x1
jax: 0.10.0
libtpu: 0.0.40
codegen_flags: <defaults>
</compile_context>

<pallas_src>
import jax
import jax.numpy as jnp
from jax.experimental import pallas as pl
from jax.experimental.pallas import tpu as pltpu

LEAKY_SLOPE = 0.2
BN_EPS = 1e-5


def _round_up(a, b):
    return ((a + b - 1) // b) * b


# ---------------------------------------------------------------------------
# Phase 1: conv as lane-dense transposed matmul + per-tile BN partial statistics.
# ---------------------------------------------------------------------------
def _conv_stats_kernel(w_ref, p_ref, y_ref, psum_ref, psq_ref, acc_ref):
    # w_ref   : (Cout, tile_K)   bf16  -- flattened OIHW weight slice
    # p_ref   : (tile_K, tile_M) bf16  -- transposed patch slice (lane dim = M)
    # y_ref   : (Cout, tile_M)   f32   -- raw conv output tile (pre-BN)
    # psum_ref: (1, Cout, 1)     f32   -- per-M-tile per-channel sum(y)
    # psq_ref : (1, Cout, 1)     f32   -- per-M-tile per-channel sum(y*y)
    # acc_ref : VMEM (Cout, tile_M) f32 scratch, persists across the K grid axis
    kk = pl.program_id(1)

    @pl.when(kk == 0)
    def _():
        acc_ref[...] = jnp.zeros_like(acc_ref)

    acc_ref[...] += jnp.dot(w_ref[...], p_ref[...],
                            preferred_element_type=jnp.float32)

    @pl.when(kk == pl.num_programs(1) - 1)
    def _():
        y = acc_ref[...]
        cout = y.shape[0]
        y_ref[...] = y
        psum_ref[...] = jnp.sum(y, axis=1, keepdims=True).reshape(1, cout, 1)
        psq_ref[...] = jnp.sum(y * y, axis=1, keepdims=True).reshape(1, cout, 1)


# ---------------------------------------------------------------------------
# Phase 2: apply the globally-reduced BatchNorm as one per-channel FMA.
# ---------------------------------------------------------------------------
def _bn_apply_kernel(scale_ref, shift_ref, y_ref, o_ref):
    # scale/shift: (Cout, 1) f32; y/o: (Cout, tile_M)
    o_ref[...] = (y_ref[...] * scale_ref[...] + shift_ref[...]).astype(o_ref.dtype)


def _im2col_transposed(xa, k, stride, pad):
    """xa: (N, C, H, W), already activated -> (C*k*k, N*Ho*Wo).

    Feature (row) order is (c, kh, kw) to match weight.reshape(Cout, C*k*k) (OIHW flatten);
    column order is (n, ho, wo) so the (Cout, M) kernel output reshapes to (Cout,N,Ho,Wo).
    """
    N, C, H, W = xa.shape
    xp = jnp.pad(xa, ((0, 0), (0, 0), (pad, pad), (pad, pad)))
    Ho = (H + 2 * pad - k) // stride + 1
    Wo = (W + 2 * pad - k) // stride + 1
    cols = []
    for i in range(k):
        for j in range(k):
            cols.append(xp[:, :, i:i + stride * Ho:stride, j:j + stride * Wo:stride])
    p = jnp.stack(cols, axis=0).reshape(k, k, N, C, Ho, Wo)
    p = p.transpose(3, 0, 1, 2, 4, 5).reshape(C * k * k, N * Ho * Wo)
    return p, Ho, Wo


def encoder_block_forward(x, weight, bias, gamma, beta, stride, *, tile_m=512):
    """x: (N, Cin, H, W) f32; weight: (Cout, Cin, 4, 4) OIHW. Returns NCHW f32.

    `bias` is accepted for API parity but unused: training-mode BatchNorm subtracts the
    per-channel batch mean, which cancels a constant per-channel bias exactly.
    """
    del bias
    N, Cin, H, W = x.shape
    Cout = weight.shape[0]
    k, pad = 4, 1

    # LeakyReLU once per input element; cast to bf16 for the MXU (f32 accumulation in-kernel).
    xa = jnp.where(x >= 0, x, LEAKY_SLOPE * x).astype(jnp.bfloat16)

    patches_t, Ho, Wo = _im2col_transposed(xa, k, stride, pad)        # (K, M) bf16
    K, M = patches_t.shape

    # Tile M (lane dim); pad with zero columns. Zero patch columns -> exactly-zero conv
    # output (no bias), so padded columns contribute nothing to the BN sums; only the
    # divisor below uses the true M.
    tile_m = _round_up(min(tile_m, _round_up(M, 128)), 128)
    m_pad = _round_up(M, tile_m)
    if m_pad != M:
        patches_t = jnp.pad(patches_t, ((0, 0), (0, m_pad - M)))
    num_m = m_pad // tile_m

    # Tile K only when it is large; block dims must be (mult of 8, mult of 128) or full.
    tile_k = 512 if (K > 512 and K % 512 == 0) else K
    num_k = K // tile_k

    w2d = weight.reshape(Cout, K).astype(jnp.bfloat16)                # (Cout, K)

    y, psum, psq = pl.pallas_call(
        _conv_stats_kernel,
        out_shape=(
            jax.ShapeDtypeStruct((Cout, m_pad), jnp.float32),
            jax.ShapeDtypeStruct((num_m, Cout, 1), jnp.float32),
            jax.ShapeDtypeStruct((num_m, Cout, 1), jnp.float32),
        ),
        grid=(num_m, num_k),                                          # reduction axis last
        in_specs=[
            pl.BlockSpec((Cout, tile_k), lambda m, kk: (0, kk)),
            pl.BlockSpec((tile_k, tile_m), lambda m, kk: (kk, m)),
        ],
        out_specs=(
            pl.BlockSpec((Cout, tile_m), lambda m, kk: (0, m)),
            pl.BlockSpec((1, Cout, 1), lambda m, kk: (m, 0, 0)),
            pl.BlockSpec((1, Cout, 1), lambda m, kk: (m, 0, 0)),
        ),
        scratch_shapes=[pltpu.VMEM((Cout, tile_m), jnp.float32)],
        compiler_params=pltpu.CompilerParams(
            dimension_semantics=("parallel", "arbitrary")),
    )(w2d, patches_t)

    # Global batch statistics (tiny (Cout,) math) folded into one per-channel FMA.
    # E[y^2]-mean^2 is clamped at 0; conv outputs are ~zero-mean so cancellation is benign
    # at these sizes (switch to a mean-shifted two-pass if M grows into the millions).
    total = jnp.float32(M)
    mean = psum[:, :, 0].sum(axis=0) / total
    var = jnp.maximum(psq[:, :, 0].sum(axis=0) / total - mean * mean, 0.0)
    scale = gamma.astype(jnp.float32) * jax.lax.rsqrt(var + BN_EPS)
    shift = beta.astype(jnp.float32) - mean * scale

    out2d = pl.pallas_call(
        _bn_apply_kernel,
        out_shape=jax.ShapeDtypeStruct((Cout, m_pad), jnp.float32),
        grid=(num_m,),
        in_specs=[
            pl.BlockSpec((Cout, 1), lambda m: (0, 0)),
            pl.BlockSpec((Cout, 1), lambda m: (0, 0)),
            pl.BlockSpec((Cout, tile_m), lambda m: (0, m)),
        ],
        out_specs=pl.BlockSpec((Cout, tile_m), lambda m: (0, m)),
        compiler_params=pltpu.CompilerParams(dimension_semantics=("parallel",)),
    )(scale.reshape(Cout, 1), shift.reshape(Cout, 1), y)

    # (Cout, M) -> (Cout, N, Ho, Wo) -> NCHW
    return out2d[:, :M].reshape(Cout, N, Ho, Wo).transpose(1, 0, 2, 3)


def _reference_nchw(x, weight, bias, gamma, beta, stride):
    """Pure-JAX fp32 reference matching the PyTorch module (MIDDLE, training-mode BN)."""
    xa = jnp.where(x >= 0, x, LEAKY_SLOPE * x)
    y = jax.lax.conv_general_dilated(
        xa, weight, window_strides=(stride, stride),
        padding=((1, 1), (1, 1)),
        dimension_numbers=("NCHW", "OIHW", "NCHW"))
    y = y + bias[None, :, None, None]
    mean = y.mean(axis=(0, 2, 3), keepdims=True)
    var = ((y - mean) ** 2).mean(axis=(0, 2, 3), keepdims=True)
    y = (y - mean) * jax.lax.rsqrt(var + BN_EPS)
    return y * gamma[None, :, None, None] + beta[None, :, None, None]


if __name__ == "__main__":
    # EncoderBlock(in_ch=4, out_ch=8, stride=2, position=Position.MIDDLE)
    N, Cin, H, W = 2, 4, 16, 16
    Cout, stride = 8, 2

    key = jax.random.PRNGKey(0)
    kx, kw, kb = jax.random.split(key, 3)
    x = jax.random.normal(kx, (N, Cin, H, W), dtype=jnp.float32)
    weight = jax.random.normal(kw, (Cout, Cin, 4, 4), dtype=jnp.float32) * 0.1
    bias = jax.random.normal(kb, (Cout,), dtype=jnp.float32) * 0.05
    gamma = jnp.ones((Cout,), dtype=jnp.float32)    # BatchNorm2d default affine init
    beta = jnp.zeros((Cout,), dtype=jnp.float32)

    out = encoder_block_forward(x, weight, bias, gamma, beta, stride)
    out = jax.block_until_ready(out)

    ref = _reference_nchw(x, weight, bias, gamma, beta, stride)
    assert out.shape == ref.shape, (out.shape, ref.shape)
    # bf16 MXU operands vs fp32 reference -> tolerance loosened accordingly (outputs are
    # BN-normalized, so absolute error is the meaningful metric).
    assert jnp.allclose(out, ref, atol=3e-2, rtol=3e-2), \
        float(jnp.max(jnp.abs(out - ref)))

    print("KERNEL_OK")
</pallas_src>

<mosaic_0001>
module attributes {stable_mosaic.version = 11 : i64} {
  func.func @_conv_stats_kernel(%arg0: i32, %arg1: i32, %arg2: memref<8x64xbf16, #tpu.memory_space<vmem>>, %arg3: memref<64x128xbf16, #tpu.memory_space<vmem>>, %arg4: memref<8x128xf32, #tpu.memory_space<vmem>>, %arg5: memref<1x8x1xf32, #tpu.memory_space<vmem>>, %arg6: memref<1x8x1xf32, #tpu.memory_space<vmem>>, %arg7: memref<8x128xf32, #tpu.memory_space<vmem>>) attributes {dimension_semantics = [#tpu.dimension_semantics<parallel>, #tpu.dimension_semantics<arbitrary>], iteration_bounds = array<i64: 1, 1>, scalar_prefetch = 0 : i64, scratch_operands = 1 : i64, tpu.core_type = #tpu.core_type<tc>, window_params = [{transform_indices = @transform_0, window_bounds = array<i64: 8, 64>}, {transform_indices = @transform_1, window_bounds = array<i64: 64, 128>}, {transform_indices = @transform_2, window_bounds = array<i64: 8, 128>}, {transform_indices = @transform_3, window_bounds = array<i64: 1, 8, 1>}, {transform_indices = @transform_4, window_bounds = array<i64: 1, 8, 1>}]} {
    %c0_i32 = arith.constant 0 : i32
    %0 = arith.cmpi eq, %arg1, %c0_i32 : i32
    %1 = arith.extui %0 : i1 to i32
    %c0_i32_0 = arith.constant 0 : i32
    %2 = arith.cmpi ne, %1, %c0_i32_0 : i32
    scf.if %2 {
      %cst_10 = arith.constant 0.000000e+00 : f32
      %12 = vector.broadcast %cst_10 : f32 to vector<8x128xf32>
      %c0_11 = arith.constant 0 : index
      %c0_12 = arith.constant 0 : index
      %13 = vector.load %arg7[%c0_11, %c0_12] : memref<8x128xf32, #tpu.memory_space<vmem>>, vector<8x128xf32>
      tpu.vector_store %arg7[%c0_11, %c0_12], %12 {strides = array<i32>} : memref<8x128xf32, #tpu.memory_space<vmem>>, vector<8x128xf32>,
    } else {
    }
    %c0 = arith.constant 0 : index
    %c0_1 = arith.constant 0 : index
    %3 = vector.load %arg7[%c0, %c0_1] : memref<8x128xf32, #tpu.memory_space<vmem>>, vector<8x128xf32>
    %c0_2 = arith.constant 0 : index
    %c0_3 = arith.constant 0 : index
    %4 = vector.load %arg2[%c0_2, %c0_3] : memref<8x64xbf16, #tpu.memory_space<vmem>>, vector<8x64xbf16>
    %c0_4 = arith.constant 0 : index
    %c0_5 = arith.constant 0 : index
    %5 = vector.load %arg3[%c0_4, %c0_5] : memref<64x128xbf16, #tpu.memory_space<vmem>>, vector<64x128xbf16>
    %cst = arith.constant dense<0.000000e+00> : vector<8x128xf32>
    %6 = tpu.matmul %4, %5, %cst {dimension_numbers = #tpu.dot_dimension_numbers<[1], [0], [0], [1], [0, 0, 1, 1], [], []>} : vector<8x64xbf16>, vector<64x128xbf16>, vector<8x128xf32> -> vector<8x128xf32>
    %7 = arith.addf %3, %6 : vector<8x128xf32>
    %c0_6 = arith.constant 0 : index
    %c0_7 = arith.constant 0 : index
    %8 = vector.load %arg7[%c0_6, %c0_7] : memref<8x128xf32, #tpu.memory_space<vmem>>, vector<8x128xf32>
    tpu.vector_store %arg7[%c0_6, %c0_7], %7 {strides = array<i32>} : memref<8x128xf32, #tpu.memory_space<vmem>>, vector<8x128xf32>,
    %c0_i32_8 = arith.constant 0 : i32
    %9 = arith.cmpi eq, %arg1, %c0_i32_8 : i32
    %10 = arith.extui %9 : i1 to i32
    %c0_i32_9 = arith.constant 0 : i32
    %11 = arith.cmpi ne, %10, %c0_i32_9 : i32
    scf.if %11 {
      %c0_10 = arith.constant 0 : index
      %c0_11 = arith.constant 0 : index
      %12 = vector.load %arg7[%c0_10, %c0_11] : memref<8x128xf32, #tpu.memory_space<vmem>>, vector<8x128xf32>
      %c0_12 = arith.constant 0 : index
      %c0_13 = arith.constant 0 : index
      %13 = vector.load %arg4[%c0_12, %c0_13] : memref<8x128xf32, #tpu.memory_space<vmem>>, vector<8x128xf32>
      tpu.vector_store %arg4[%c0_12, %c0_13], %12 {strides = array<i32>} : memref<8x128xf32, #tpu.memory_space<vmem>>, vector<8x128xf32>,
      %cst_14 = arith.constant dense<0.000000e+00> : vector<8xf32>
      %14 = vector.multi_reduction <add>, %12, %cst_14 [1] : vector<8x128xf32> to vector<8xf32>
      %15 = vector.shape_cast %14 : vector<8xf32> to vector<8x1xf32>
      %16 = vector.shape_cast %15 : vector<8x1xf32> to vector<1x8x1xf32>
      %c0_15 = arith.constant 0 : index
      %c0_16 = arith.constant 0 : index
      %c0_17 = arith.constant 0 : index
      %17 = vector.load %arg5[%c0_15, %c0_16, %c0_17] : memref<1x8x1xf32, #tpu.memory_space<vmem>>, vector<1x8x1xf32>
      tpu.vector_store %arg5[%c0_15, %c0_16, %c0_17], %16 {strides = array<i32>} : memref<1x8x1xf32, #tpu.memory_space<vmem>>, vector<1x8x1xf32>,
      %18 = arith.mulf %12, %12 : vector<8x128xf32>
      %cst_18 = arith.constant dense<0.000000e+00> : vector<8xf32>
      %19 = vector.multi_reduction <add>, %18, %cst_18 [1] : vector<8x128xf32> to vector<8xf32>
      %20 = vector.shape_cast %19 : vector<8xf32> to vector<8x1xf32>
      %21 = vector.shape_cast %20 : vector<8x1xf32> to vector<1x8x1xf32>
      %c0_19 = arith.constant 0 : index
      %c0_20 = arith.constant 0 : index
      %c0_21 = arith.constant 0 : index
      %22 = vector.load %arg6[%c0_19, %c0_20, %c0_21] : memref<1x8x1xf32, #tpu.memory_space<vmem>>, vector<1x8x1xf32>
      tpu.vector_store %arg6[%c0_19, %c0_20, %c0_21], %21 {strides = array<i32>} : memref<1x8x1xf32, #tpu.memory_space<vmem>>, vector<1x8x1xf32>,
    } else {
    }
    return
  }
  func.func @transform_0(%arg0: i32, %arg1: i32) -> (i32, i32) {
    %c0_i32 = arith.constant 0 : i32
    %c0_i32_0 = arith.constant 0 : i32
    return %c0_i32, %arg1 : i32, i32
  }
  func.func @transform_1(%arg0: i32, %arg1: i32) -> (i32, i32) {
    %c0_i32 = arith.constant 0 : i32
    return %arg1, %arg0 : i32, i32
  }
  func.func @transform_2(%arg0: i32, %arg1: i32) -> (i32, i32) {
    %c0_i32 = arith.constant 0 : i32
    %c0_i32_0 = arith.constant 0 : i32
    return %c0_i32, %arg0 : i32, i32
  }
  func.func @transform_3(%arg0: i32, %arg1: i32) -> (i32, i32, i32) {
    %c0_i32 = arith.constant 0 : i32
    %c0_i32_0 = arith.constant 0 : i32
    %c0_i32_1 = arith.constant 0 : i32
    return %arg0, %c0_i32, %c0_i32_0 : i32, i32, i32
  }
  func.func @transform_4(%arg0: i32, %arg1: i32) -> (i32, i32, i32) {
    %c0_i32 = arith.constant 0 : i32
    %c0_i32_0 = arith.constant 0 : i32
    %c0_i32_1 = arith.constant 0 : i32
    return %arg0, %c0_i32, %c0_i32_0 : i32, i32, i32
  }
}

</mosaic_0001>

<llo_original>
// kernel: tpu_custom_call.1
$region0: #{tpu_custom_call.1}
  #allocation0 [shape = 'u32[]', space=smem, size = 0x4, offset = 0x4, fixed_abs, tag = 'smem constant byte address 0x4 - core index']
  #allocation1 [shape = 'u32[144,128]{1,0:T(1,128)}', space=vmem, size = 0x12000, scoped, tag = 'internal scratch']
  #allocation2 [shape = 'f32[8,128]{1,0:T(8,128)}', space=vmem, size = 0x1000, scoped, tag = 'scratch operand']
  %s0 = inlined_call_operand.hbm [shape: bf16[8,64], index: 0, kind: input, shape index: {}]
  %s1 = inlined_call_operand.hbm [shape: bf16[64,128], index: 1, kind: input, shape index: {}]
  %s2 = inlined_call_operand.hbm [shape: f32[8,128], index: 2, kind: output, shape index: {0}]
  %s3 = inlined_call_operand.vmem [shape: f32[1,8,1], index: 3, kind: output, shape index: {1}]
  %s4 = inlined_call_operand.vmem [shape: f32[1,8,1], index: 4, kind: output, shape index: {2}]
  %5 = xla_tuple %s2, %s3, %s4
  %s6 = sld [smem:[#allocation0]]
  $region50: #{tpu_custom_call.1} parent=0
    _
  %s8 = ssub.s32 1, %s6
  %s9 = scalar_select 0, %s8, %s6
  $region1: #{tpu_custom_call.1} parent=0
    #allocation3 [shape = 'u8[2048]{0}', space=vmem, size = 0x800, scoped, tag = 'input window, operand 0, single buffered']
    #allocation4 [shape = 's32[1]{0}', space=sflag, size = 0x4, scoped, tag = 'scoped memory for tpu_custom_call.1']
    #allocation5 [shape = 's32[1]{0}', space=sflag, size = 0x4, scoped, tag = 'scoped memory for tpu_custom_call.1']
    #allocation6 [shape = 'u8[16384]{0}', space=vmem, size = 0x4000, scoped, tag = 'input window, operand 1, single buffered']
    #allocation7 [shape = 's32[1]{0}', space=sflag, size = 0x4, scoped, tag = 'scoped memory for tpu_custom_call.1']
    #allocation8 [shape = 'u8[4096]{0}', space=vmem, size = 0x1000, scoped, tag = 'output window, operand 0, single buffered']
    %10 = vsyncpa [#allocation4], 0
    %11 = vsyncpa [#allocation7], 0
    %12 = vsyncpa [#allocation5], 0
    // Predicated region
    $region2: #{tpu_custom_call.1} parent=1 // pred_check
      _
    $region3: #{tpu_custom_call.1} parent=1 // pred_check_branch
      %14 = sbr.rel (0) target = $region5
    $region4: #{tpu_custom_call.1} parent=1 // pred_region
      %s16 = ssub.s32 64, 64
      %17 = vsyncadd [#allocation4], %s16
      %s19 = sshll.u32 [#allocation3], 4
      %s20 = int_to_ptr.vmem [resolvable:$true] %s19
      %22 = dma.hbm_to_vmem [thread:$0]  %s0, 64, %s20, [#allocation4]
    $region5: #{tpu_custom_call.1} parent=1 // pred_fallthru
      _
    // Predicated region
    $region6: #{tpu_custom_call.1} parent=1 // pred_check
      _
    $region7: #{tpu_custom_call.1} parent=1 // pred_check_branch
      %24 = sbr.rel (0) target = $region9
    $region8: #{tpu_custom_call.1} parent=1 // pred_region
      %s26 = ssub.s32 512, 512
      %27 = vsyncadd [#allocation7], %s26
      %s28 = sshll.u32 [#allocation6], 4
      %s29 = int_to_ptr.vmem [resolvable:$true] %s28
      %34 = dma.hbm_to_vmem [thread:$0]  %s1, 512, %s29, [#allocation7], 64, 64, 4
    $region9: #{tpu_custom_call.1} parent=1 // pred_fallthru
      _
    // Predicated region
    $region10: #{tpu_custom_call.1} parent=1 // pred_check
      _
    $region11: #{tpu_custom_call.1} parent=1 // pred_check_branch
      %36 = sbr.rel (0) target = $region13
    $region12: #{tpu_custom_call.1} parent=1 // pred_region
      %37 = dma.done [#allocation4], 64
    $region13: #{tpu_custom_call.1} parent=1 // pred_fallthru
      _
    // Predicated region
    $region14: #{tpu_custom_call.1} parent=1 // pred_check
      _
    $region15: #{tpu_custom_call.1} parent=1 // pred_check_branch
      %39 = sbr.rel (0) target = $region17
    $region16: #{tpu_custom_call.1} parent=1 // pred_region
      %40 = dma.done [#allocation7], 512
    $region17: #{tpu_custom_call.1} parent=1 // pred_fallthru
      _
    %p42 = scmp.eq.s32.totalorder 0, 0
    // Predicated region
    $region18: #{tpu_custom_call.1} parent=1 // pred_check
      %p43 = pneg %p42
    $region19: #{tpu_custom_call.1} parent=1 // pred_check_branch
      %45 = sbr.rel (%p43) target = $region21
    $region20: #{tpu_custom_call.1} parent=1 // pred_region
      %46 = vst [vmem:[#allocation2] sm:$0xff] 0.0
    $region21: #{tpu_custom_call.1} parent=1 // pred_fallthru
      _
    %v47 = vld [vmem:[#allocation2] sm:$0xff]
    %v48 = vld [vmem:[#allocation3] sm:$0xf]
    %v49 = vld [vmem:[#allocation6] sm:$0xf]
    %v50 = vld [vmem:[#allocation6 + $0x4] sm:$0xf]
    %v51 = vld [vmem:[#allocation6 + $0x8] sm:$0xf]
    %v52 = vld [vmem:[#allocation6 + $0xc] sm:$0xf]
    %v53 = vld [vmem:[#allocation6 + $0x10] sm:$0xf]
    %v54 = vld [vmem:[#allocation6 + $0x14] sm:$0xf]
    %v55 = vld [vmem:[#allocation6 + $0x18] sm:$0xf]
    %v56 = vld [vmem:[#allocation6 + $0x1c] sm:$0xf]
    %v65 = vunpack.c.l.b16 %v49
    %v66 = vunpack.c.l.b16 %v50
    %v67 = vunpack.c.l.b16 %v51
    %v68 = vunpack.c.l.b16 %v52
    %v69 = vunpack.c.l.b16 %v53
    %v70 = vunpack.c.l.b16 %v54
    %v71 = vunpack.c.l.b16 %v55
    %v72 = vunpack.c.l.b16 %v56
    %v73 = vpack.c.b16 %v66, %v65
    %v74 = vpack.c.b16 %v68, %v67
    %v75 = vpack.c.b16 %v70, %v69
    %v76 = vpack.c.b16 %v72, %v71
    %vm81 = vcmask 523264
    %v83 = vsel %vm81, %v48, 0
    %85 = vmatprep.subr.bf16.mxu0 0
    %86 = vmatpush1.bf16.msra.mxu0 0
    %87 = vmatprep.subr.bf16.mxu0 0
    %88 = vmatpush1.bf16.msra.mxu0 0
    %89 = vmatprep.subr.bf16.mxu0 0
    %90 = vmatpush1.bf16.msra.mxu0 0
    %91 = vmatprep.subr.bf16.mxu0 0
    %92 = vmatpush1.bf16.msra.mxu0 0
    %93 = vmatprep.subr.bf16.mxu0 0
    %94 = vmatpush1.bf16.msra.mxu0 %v76
    %95 = vmatprep.subr.bf16.mxu0 0
    %96 = vmatpush1.bf16.msra.mxu0 %v75
    %97 = vmatprep.subr.bf16.mxu0 0
    %98 = vmatpush1.bf16.msra.mxu0 %v74
    %99 = vmatprep.subr.bf16.mxu0 0
    %100 = vmatpush1.bf16.msra.mxu0 %v73
    %101 = vmatprep.subr.bf16.mxu0 0
    %102 = vmatpush2.bf16.msra.mxu0 0
    %103 = vmatprep.subr.bf16.mxu0 0
    %104 = vmatpush2.bf16.msra.mxu0 0
    %105 = vmatprep.subr.bf16.mxu0 0
    %106 = vmatpush2.bf16.msra.mxu0 0
    %107 = vmatprep.subr.bf16.mxu0 0
    %108 = vmatpush2.bf16.msra.mxu0 0
    %109 = vmatprep.subr.bf16.mxu0 0
    %110 = vmatpush2.bf16.msra.mxu0 0
    %111 = vmatprep.subr.bf16.mxu0 0
    %112 = vmatpush2.bf16.msra.mxu0 0
    %113 = vmatprep.subr.bf16.mxu0 0
    %114 = vmatpush2.bf16.msra.mxu0 0
    %115 = vmatprep.subr.bf16.mxu0 0
    %116 = vmatpush2.bf16.msra.mxu0 0
    %117 = vmatprep.mubr.bf16.mxu0 0
    %118 = vmatmul.mubr.bf16.gmra.mxu0 %v83
    %v119 = vpop.f32.mrf.mxu0
    %v120 = vadd.f32 0.0, %v119
    %v121 = vpop.f32.mrf.mxu0
    %v122 = vpop.f32.mrf.mxu0
    %v123 = vpop.f32.mrf.mxu0
    %124 = vdwg.mxu0
    %v125 = vadd.f32 %v47, %v120
    %126 = vst [vmem:[#allocation2] sm:$0xff] %v125
    // Predicated region
    $region22: #{tpu_custom_call.1} parent=1 // pred_check
      %p127 = pneg %p42
    $region23: #{tpu_custom_call.1} parent=1 // pred_check_branch
      %129 = sbr.rel (%p127) target = $region25
    $region24: #{tpu_custom_call.1} parent=1 // pred_region
      %v130 = vld [vmem:[#allocation2] sm:$0xff]
      %131 = vst [vmem:[#allocation8] sm:$0xff] %v130
      %132 = vadd.xlane.f32.xlu0 %v130
      %v133 = vpop.xlane.xlu0 %132
      %vm134 = vcmask 7168
      %135 = vst.msk [vmem:[%s3] sm:$0xff] %vm134, %v133
      %v136 = vmul.f32 %v130, %v130
      %137 = vadd.xlane.f32.xlu0 %v136
      %v138 = vpop.xlane.xlu0 %137
      %139 = vst.msk [vmem:[%s4] sm:$0xff] %vm134, %v138
    $region25: #{tpu_custom_call.1} parent=1 // pred_fallthru
      _
    // Predicated region
    $region26: #{tpu_custom_call.1} parent=1 // pred_check
      _
    $region27: #{tpu_custom_call.1} parent=1 // pred_check_branch
      %141 = sbr.rel (0) target = $region29
    $region28: #{tpu_custom_call.1} parent=1 // pred_region
      %s143 = ssub.s32 128, 128
      %144 = vsyncadd [#allocation5], %s143
      %s146 = sshll.u32 [#allocation8], 4
      %s147 = int_to_ptr.vmem [resolvable:$true] %s146
      %149 = dma.vmem_to_hbm [thread:$0]  %s147, 128, %s2, [#allocation5]
    $region29: #{tpu_custom_call.1} parent=1 // pred_fallthru
      _
    // Predicated region
    $region30: #{tpu_custom_call.1} parent=1 // pred_check
      _
    $region31: #{tpu_custom_call.1} parent=1 // pred_check_branch
      %151 = sbr.rel (0) target = $region33
    $region32: #{tpu_custom_call.1} parent=1 // pred_region
      _
    $region33: #{tpu_custom_call.1} parent=1 // pred_fallthru
      _
    // Predicated region
    $region34: #{tpu_custom_call.1} parent=1 // pred_check
      _
    $region35: #{tpu_custom_call.1} parent=1 // pred_check_branch
      %153 = sbr.rel (0) target = $region37
    $region36: #{tpu_custom_call.1} parent=1 // pred_region
      _
    $region37: #{tpu_custom_call.1} parent=1 // pred_fallthru
      _
    // Predicated region
    $region38: #{tpu_custom_call.1} parent=1 // pred_check
      _
    $region39: #{tpu_custom_call.1} parent=1 // pred_check_branch
      %155 = sbr.rel (0) target = $region41
    $region40: #{tpu_custom_call.1} parent=1 // pred_region
      %156 = dma.done [#allocation5], 128
    $region41: #{tpu_custom_call.1} parent=1 // pred_fallthru
      _
    // Predicated region
    $region42: #{tpu_custom_call.1} parent=1 // pred_check
      _
    $region43: #{tpu_custom_call.1} parent=1 // pred_check_branch
      %158 = sbr.rel (0) target = $region45
    $region44: #{tpu_custom_call.1} parent=1 // pred_region
      _
    $region45: #{tpu_custom_call.1} parent=1 // pred_fallthru
      _
    // Predicated region
    $region46: #{tpu_custom_call.1} parent=1 // pred_check
      _
    $region47: #{tpu_custom_call.1} parent=1 // pred_check_branch
      %160 = sbr.rel (0) target = $region49
    $region48: #{tpu_custom_call.1} parent=1 // pred_region
      _
    $region49: #{tpu_custom_call.1} parent=1 // pred_fallthru
      _
    %161 = vsyncpa [#allocation4], 1
    %162 = vsyncpa [#allocation7], 1
    %163 = vsyncpa [#allocation5], 1

</llo_original>
